<compile_context>
chip_gen: v5e
topology: v5e:2x2
jax: 0.10.0
libtpu: 0.0.40
codegen_flags: <defaults>
</compile_context>

<pallas_src>
import jax
import jax.numpy as jnp
from jax.experimental import pallas as pl
from jax.experimental.pallas import tpu as pltpu


def _concat_dma_kernel(a_hbm, b_hbm, out_hbm, sem):
    """Column-concat via two direct HBM->HBM strided DMAs.

    a_hbm:   (N, w1)  HBM ref
    b_hbm:   (N, w2)  HBM ref
    out_hbm: (N, w1 + w2) HBM ref
    sem:     DMA semaphore array of shape (2,)
    """
    w1 = a_hbm.shape[1]
    w2 = b_hbm.shape[1]
    # Strided-destination DMAs: each output row receives a contiguous chunk of
    # w1 (resp. w2) elements at column offset 0 (resp. w1); row stride is
    # w1 + w2.  Both copies are issued back-to-back so the DMA engines overlap.
    cp_a = pltpu.make_async_copy(a_hbm, out_hbm.at[:, pl.ds(0, w1)], sem.at[0])
    cp_b = pltpu.make_async_copy(b_hbm, out_hbm.at[:, pl.ds(w1, w2)], sem.at[1])
    cp_a.start()
    cp_b.start()
    cp_a.wait()
    cp_b.wait()


def gate_forward_pallas(seq, seq_cluster):
    """Channel-dim concat (NCHW) as two direct HBM->HBM DMAs."""
    assert seq.shape[0] == seq_cluster.shape[0]
    assert seq.shape[2:] == seq_cluster.shape[2:]
    assert seq.dtype == seq_cluster.dtype
    N, C1, H, W = seq.shape
    C2 = seq_cluster.shape[1]
    w1, w2 = C1 * H * W, C2 * H * W
    wo = w1 + w2
    itemsize = jnp.dtype(seq.dtype).itemsize

    # Metadata-only 2-D views of the contiguous NCHW tensors: channel concat
    # becomes a column concat of (N, w1) and (N, w2) into (N, w1 + w2).
    a = seq.reshape(N, w1)
    b = seq_cluster.reshape(N, w2)

    out2d = pl.pallas_call(
        _concat_dma_kernel,
        out_shape=jax.ShapeDtypeStruct((N, wo), seq.dtype),
        # All operands stay in HBM (pl.ANY): no auto-DMA, no VMEM round trip,
        # no grid, no tile-size sensitivity across v5e/v6e/v7x.
        in_specs=[
            pl.BlockSpec(memory_space=pl.ANY),
            pl.BlockSpec(memory_space=pl.ANY),
        ],
        out_specs=pl.BlockSpec(memory_space=pl.ANY),
        scratch_shapes=[pltpu.SemaphoreType.DMA((2,))],
        cost_estimate=pl.CostEstimate(
            flops=0,
            transcendentals=0,
            bytes_accessed=2 * N * wo * itemsize,  # read once, write once
        ),
    )(a, b)
    return out2d.reshape(N, C1 + C2, H, W)


def gate_forward(seq, seq_cluster, use_pallas=False):
    """gate.forward: out = concat((seq, seq_cluster), dim=1)."""
    if not use_pallas:
        # XLA's native concatenate is already a near-roofline fused copy; a
        # standalone Pallas concat can at best tie it, so it is the default.
        # (Prefer fusing the concat into the consumer kernel where possible.)
        return jnp.concatenate((seq, seq_cluster), axis=1)
    return gate_forward_pallas(seq, seq_cluster)


def init_gate_params(key, c_in, dtype=jnp.float32):
    """Deterministic init of the (unused) Conv2d(c_in, c_in//2, 1x1) params."""
    # TODO(synk): conv1 is defined in gate.__init__ but never used in forward;
    # params exist for shape fidelity only, no kernel is emitted for them.
    kw, kb = jax.random.split(key)
    c_out = c_in // 2
    fan_in = c_in * 1 * 1
    bound = 1.0 / jnp.sqrt(fan_in)
    weight = jax.random.uniform(kw, (c_out, c_in, 1, 1), dtype, -bound, bound)
    bias = jax.random.uniform(kb, (c_out,), dtype, -bound, bound)
    return {"conv1_weight": weight, "conv1_bias": bias}


if __name__ == "__main__":
    key = jax.random.PRNGKey(0)
    k_seq, k_clu, k_par = jax.random.split(key, 3)

    # Small shapes consistent with the module's NCHW conv inputs.
    N, C, H, W = 2, 4, 16, 16
    seq = jax.random.normal(k_seq, (N, C, H, W), jnp.float32)
    seq_cluster = jax.random.normal(k_clu, (N, C, H, W), jnp.float32)

    _params = init_gate_params(k_par, c_in=2 * C)  # gate(c_in) with c_in = 2*C

    # Exercise the Pallas (direct HBM->HBM DMA) kernel explicitly.
    out = gate_forward(seq, seq_cluster, use_pallas=True)
    out = jax.block_until_ready(out)

    ref = jnp.concatenate((seq, seq_cluster), axis=1)
    assert out.shape == (N, 2 * C, H, W)
    assert out.dtype == ref.dtype
    assert jnp.array_equal(out, ref)

    # Also check the default dispatch path (XLA native concatenate).
    out_default = jax.block_until_ready(gate_forward(seq, seq_cluster))
    assert jnp.array_equal(out_default, ref)

    print("KERNEL_OK")
</pallas_src>

<mosaic_0001>
module attributes {stable_mosaic.version = 11 : i64} {
  func.func @_concat_dma_kernel(%arg0: memref<2x1024xf32, #tpu.memory_space<any>>, %arg1: memref<2x1024xf32, #tpu.memory_space<any>>, %arg2: memref<2x2048xf32, #tpu.memory_space<any>>, %arg3: memref<2x!tpu.dma_semaphore, #tpu.memory_space<semaphore_mem>>) attributes {dimension_semantics = [], scalar_prefetch = 0 : i64, scratch_operands = 1 : i64, tpu.core_type = #tpu.core_type<tc>} {
    %c0_i32 = arith.constant 0 : i32
    %c0_i32_0 = arith.constant 0 : i32
    %c0_i32_1 = arith.constant 0 : i32
    %0 = tpu.memref_slice %arg2[%c0_i32_0, %c0_i32_1] : memref<2x2048xf32, #tpu.memory_space<any>> -> memref<2x1024xf32, #tpu.memory_space<any>>
    %1 = tpu.memref_slice %arg3[%c0_i32] : memref<2x!tpu.dma_semaphore, #tpu.memory_space<semaphore_mem>> -> memref<1x!tpu.dma_semaphore, #tpu.memory_space<semaphore_mem>>
    %2 = tpu.memref_squeeze %1 : memref<1x!tpu.dma_semaphore, #tpu.memory_space<semaphore_mem>> -> memref<!tpu.dma_semaphore, #tpu.memory_space<semaphore_mem>>
    tpu.enqueue_dma source(%arg0 : memref<2x1024xf32, #tpu.memory_space<any>>) target(%0 : memref<2x1024xf32, #tpu.memory_space<any>>) target_semaphore(%2 : memref<!tpu.dma_semaphore, #tpu.memory_space<semaphore_mem>>)
    %c1_i32 = arith.constant 1 : i32
    %c0_i32_2 = arith.constant 0 : i32
    %c1024_i32 = arith.constant 1024 : i32
    %3 = tpu.memref_slice %arg2[%c0_i32_2, %c1024_i32] : memref<2x2048xf32, #tpu.memory_space<any>> -> memref<2x1024xf32, #tpu.memory_space<any>>
    %4 = tpu.memref_slice %arg3[%c1_i32] : memref<2x!tpu.dma_semaphore, #tpu.memory_space<semaphore_mem>> -> memref<1x!tpu.dma_semaphore, #tpu.memory_space<semaphore_mem>>
    %5 = tpu.memref_squeeze %4 : memref<1x!tpu.dma_semaphore, #tpu.memory_space<semaphore_mem>> -> memref<!tpu.dma_semaphore, #tpu.memory_space<semaphore_mem>>
    tpu.enqueue_dma source(%arg1 : memref<2x1024xf32, #tpu.memory_space<any>>) target(%3 : memref<2x1024xf32, #tpu.memory_space<any>>) target_semaphore(%5 : memref<!tpu.dma_semaphore, #tpu.memory_space<semaphore_mem>>)
    %c0_i32_3 = arith.constant 0 : i32
    %c0_i32_4 = arith.constant 0 : i32
    %c0_i32_5 = arith.constant 0 : i32
    %6 = tpu.memref_slice %arg2[%c0_i32_4, %c0_i32_5] : memref<2x2048xf32, #tpu.memory_space<any>> -> memref<2x1024xf32, #tpu.memory_space<any>>
    %7 = tpu.memref_slice %arg3[%c0_i32_3] : memref<2x!tpu.dma_semaphore, #tpu.memory_space<semaphore_mem>> -> memref<1x!tpu.dma_semaphore, #tpu.memory_space<semaphore_mem>>
    %8 = tpu.memref_squeeze %7 : memref<1x!tpu.dma_semaphore, #tpu.memory_space<semaphore_mem>> -> memref<!tpu.dma_semaphore, #tpu.memory_space<semaphore_mem>>
    tpu.wait_dma2 semaphore(%8 : memref<!tpu.dma_semaphore, #tpu.memory_space<semaphore_mem>>) src(%arg0 : memref<2x1024xf32, #tpu.memory_space<any>>) dst(%6 : memref<2x1024xf32, #tpu.memory_space<any>>)
    %c1_i32_6 = arith.constant 1 : i32
    %c0_i32_7 = arith.constant 0 : i32
    %c1024_i32_8 = arith.constant 1024 : i32
    %9 = tpu.memref_slice %arg2[%c0_i32_7, %c1024_i32_8] : memref<2x2048xf32, #tpu.memory_space<any>> -> memref<2x1024xf32, #tpu.memory_space<any>>
    %10 = tpu.memref_slice %arg3[%c1_i32_6] : memref<2x!tpu.dma_semaphore, #tpu.memory_space<semaphore_mem>> -> memref<1x!tpu.dma_semaphore, #tpu.memory_space<semaphore_mem>>
    %11 = tpu.memref_squeeze %10 : memref<1x!tpu.dma_semaphore, #tpu.memory_space<semaphore_mem>> -> memref<!tpu.dma_semaphore, #tpu.memory_space<semaphore_mem>>
    tpu.wait_dma2 semaphore(%11 : memref<!tpu.dma_semaphore, #tpu.memory_space<semaphore_mem>>) src(%arg1 : memref<2x1024xf32, #tpu.memory_space<any>>) dst(%9 : memref<2x1024xf32, #tpu.memory_space<any>>)
    return
  }
}

</mosaic_0001>

<llo_original>
// kernel: tpu_custom_call.1
$region0: #{tpu_custom_call.1}
  #allocation0 [shape = 'u32[]', space=smem, size = 0x4, offset = 0x4, fixed_abs, tag = 'smem constant byte address 0x4 - core index']
  #allocation1 [shape = 'u32[72,128]{1,0:T(1,128)}', space=vmem, size = 0x9000, scoped, tag = 'internal scratch']
  #allocation2 [shape = 's32[2]{0}', space=sflag, size = 0x8, scoped, tag = 'scratch operand']
  #allocation3 [shape = 's32[]', space=sflag, size = 0x4, offset = 0, fixed_abs, tag = 'sflag constant byte address 0x0 - dummy sync flag']
  #allocation4 [shape = 'u32[0]{0}', space=smem, size = 0, offset = 0, fixed_abs, tag = 'smem constant byte address 0x0 - null']
  #allocation5 [shape = 's32[]', space=sflag, size = 0x4, offset = 0, fixed_abs, tag = 'sflag constant byte address 0x0 - dummy sync flag']
  #allocation6 [shape = 'u32[0]{0}', space=smem, size = 0, offset = 0, fixed_abs, tag = 'smem constant byte address 0x0 - null']
  %s0 = inlined_call_operand.hbm [shape: f32[2,1024], index: 0, kind: input, shape index: {}]
  %s1 = inlined_call_operand.hbm [shape: f32[2,1024], index: 1, kind: input, shape index: {}]
  %s2 = inlined_call_operand.hbm [shape: f32[2,2048], index: 2, kind: output, shape index: {}]
  %s3 = sld [smem:[#allocation0]]
  $region2: #{tpu_custom_call.1} parent=0
    _
  %s5 = ssub.s32 1, %s3
  %s6 = scalar_select 0, %s5, %s3
  %s8 = sshll.u32 1, 14
  %s9 = sxor.u32 4294967295, %s8
  %s11 = sshll.u32 %s0, 4
  %s12 = int_to_ptr.hbm [resolvable:$true] %s11
  %s13 = sshll.u32 %s2, 4
  %s14 = int_to_ptr.hbm [resolvable:$true] %s13
  %17 = dma.general %s12, 256, %s14, [#allocation2], [#allocation3], [#allocation4], 0, 0
  %s18 = scalar_lea.hbm %s2, 16
  %s19 = scalar_lea.sflag [#allocation2], 1
  %s21 = sshll.u32 1, 14
  %s22 = sxor.u32 4294967295, %s21
  %s24 = sshll.u32 %s1, 4
  %s25 = int_to_ptr.hbm [resolvable:$true] %s24
  %s26 = sshll.u32 %s18, 4
  %s27 = int_to_ptr.hbm [resolvable:$true] %s26
  %30 = dma.general %s25, 256, %s27, %s19, [#allocation5], [#allocation6], 0, 0
  %s31 = smul.u32 2, 1
  %s32 = smul.u32 %s31, 8
  %s33 = sshll.u32 %s32, 4
  %34 = dma.done [#allocation2], %s33
  %s35 = sshll.u32 %s32, 4
  %36 = dma.done %s19, %s35
  %37 = vsyncmov [#allocation2]
  %s38 = vpop.sfrf %37
  %p39 = scmp.eq.s32.totalorder %s38, 0
  %p40 = pneg %p39
  %42 = shalt.err (%p40)
  %s43 = scalar_lea.sflag [#allocation2], 1
  %44 = vsyncmov %s43
  %s45 = vpop.sfrf %44
  %p46 = scmp.eq.s32.totalorder %s45, 0
  %p47 = pneg %p46
  %49 = shalt.err (%p47)

</llo_original>
